<compile_context>
chip_gen: v7x
topology: tpu7x:2x2x1
jax: 0.10.0
libtpu: 0.0.40
codegen_flags: <defaults>
</compile_context>

<pallas_src>
import functools

import jax
import jax.numpy as jnp
import numpy as np
from jax import lax
from jax.experimental import pallas as pl
from jax.experimental.pallas import tpu as pltpu

BN_EPS = 1e-5


# ----------------------------------------------------------------------------
# Pass 1: BatchNorm2d batch statistics via per-image Gram matrices.
# For each image the kernel accumulates  G = sum_pixels x x^T  ([Cin, Cin]) and
# sum_pixels x ([Cin, 1]) into a resident [Cin, Cin+1] output block (same block
# index across the inner "arbitrary" reduction axis).  The wrapper derives
#   sum(W x)      = W @ sum(x)
#   sum((W x)_o^2) = w_o G w_o^T
# so the spatial reduction runs on the MXU and is independent of Cout.
# Always f32 (stats must not drift with compute_dtype=bfloat16).
# ----------------------------------------------------------------------------
def _gram_stats_kernel(x_ref, stat_ref):
    @pl.when(pl.program_id(1) == 0)
    def _init():
        stat_ref[...] = jnp.zeros_like(stat_ref)

    x = x_ref[0]                                                      # [Cin, TS] f32
    g = lax.dot_general(x, x,
                        dimension_numbers=(((1,), (1,)), ((), ())),
                        preferred_element_type=jnp.float32)           # [Cin, Cin]
    s = jnp.sum(x, axis=1, keepdims=True)                             # [Cin, 1]
    stat_ref[...] += jnp.concatenate([g, s], axis=1)                  # [Cin, Cin+1]


# ----------------------------------------------------------------------------
# Pass 2 (per image): fused 1x1 conv (BN folded) + ReLU  ->  phase-decomposed
# ConvTranspose2d, computed channel-major (lane axis = spatial) end-to-end.
# ----------------------------------------------------------------------------
def _fused_transup_kernel(x_ref, w1_ref, b1_ref, wkkT_ref, b2_ref, o_ref, acc_ref,
                          *, H, W, K, S, Qh, Qw):
    Co = o_ref.shape[1]

    # ---- 1x1 conv with BN scale folded into the weights, BN shift folded into the bias
    x = x_ref[0].astype(w1_ref.dtype)                                 # [Cin, H*W]
    y = jnp.dot(w1_ref[...], x, preferred_element_type=jnp.float32)   # [Co, H*W]
    y = jnp.maximum(y + b1_ref[...], 0.0)                             # BN shift + ReLU (f32 VPU)
    y = y.astype(wkkT_ref.dtype)

    # ---- all K*K transposed-conv taps with a single matmul; rows = (kh, kw, cout)
    t = jnp.dot(wkkT_ref[...], y, preferred_element_type=jnp.float32)  # [K*K*Co, H*W]

    # ---- sub-pixel (phase) decomposition: accumulate shifted taps into a VMEM scratch
    rows = []
    for ph in range(S):
        cols = []
        for pw in range(S):
            acc_ref[...] = jnp.zeros_like(acc_ref)                     # [Co, Qh, Qw]
            for mh, kh in enumerate(range(ph, K, S)):
                for mw, kw in enumerate(range(pw, K, S)):
                    c0 = (kh * K + kw) * Co
                    tap = t[c0:c0 + Co, :].reshape(Co, H, W)            # [Co, H, W]
                    acc_ref[:, mh:mh + H, mw:mw + W] += tap             # in-place shift-add
            cols.append(acc_ref[...])
        # interleave width phases:  ow = S*qw + pw
        rows.append(jnp.stack(cols, axis=-1).reshape(Co, Qh, Qw * S))
    # interleave height phases:    oh = S*qh + ph
    out = jnp.stack(rows, axis=2).reshape(Co, Qh * S, Qw * S)

    # channel-major store of the phase-padded output; Ho/Wo crop happens in the wrapper
    o_ref[0] = (out + b2_ref[...][:, :, None]).astype(o_ref.dtype)


def _pass1_tile(hw, cin):
    """Largest power-of-two spatial tile within a ~8 MiB double-buffered VMEM budget."""
    budget_elems = (8 << 20) // (2 * 4 * max(cin, 1))
    cap = min(65536, max(budget_elems, 128), pl.next_power_of_2(max(hw, 128)))
    ts = 128
    while ts * 2 <= cap:
        ts *= 2
    return ts


def _vmem_limit_bytes():
    """~80% of physical VMEM (v5e/v6e: ~100 MiB, v7x: ~51 MiB); None if unqueryable."""
    try:
        return int(pltpu.get_tpu_info().vmem_capacity_bytes * 0.8)
    except Exception:
        return None


# ----------------------------------------------------------------------------
# Wrapper (NCHW in / NCHW out, like the PyTorch module).
# ----------------------------------------------------------------------------
def transup_conv_new(x_nchw, params, *, kernel_size, stride,
                     compute_dtype=jnp.float32):
    w1, b1, gamma, beta, w2, b2 = params
    N, Cin, H, W = x_nchw.shape
    Cout = w1.shape[0]                      # torch Conv2d weight: [Cout, Cin, 1, 1]
    k, s = kernel_size, stride
    HW = H * W
    Ho, Wo = (H - 1) * s + k, (W - 1) * s + k
    Qh, Qw = -(-Ho // s), -(-Wo // s)       # per-phase (padded) output extent

    x_flat = x_nchw.reshape(N, Cin, HW).astype(jnp.float32)   # free reshape, stays NCHW
    w1_mat = w1[:, :, 0, 0]                                    # [Cout, Cin]

    # ---- pass 1: BN batch statistics (Gram matrices, f32, batch axis "parallel") ----
    ts = _pass1_tile(HW, Cin)
    hwp = -(-HW // ts) * ts
    x_p = x_flat if hwp == HW else jnp.pad(x_flat, ((0, 0), (0, 0), (0, hwp - HW)))
    # (zero padding is exact for Gram / sum statistics; the true count is used below)
    stats = pl.pallas_call(
        _gram_stats_kernel,
        grid=(N, hwp // ts),
        in_specs=[pl.BlockSpec((1, Cin, ts), lambda n, t: (n, 0, t))],
        out_specs=pl.BlockSpec((1, Cin, Cin + 1), lambda n, t: (n, 0, 0)),
        out_shape=jax.ShapeDtypeStruct((N, Cin, Cin + 1), jnp.float32),
        compiler_params=pltpu.CompilerParams(
            dimension_semantics=("parallel", "arbitrary")),
    )(x_p)
    stats = jnp.sum(stats, axis=0)                      # combine per-image partials
    G = stats[:, :Cin]                                  # [Cin, Cin]
    sx = stats[:, Cin]                                  # [Cin]

    m = float(N * HW)
    mean_wx = (w1_mat @ sx) / m
    sumsq = jnp.einsum('oc,cd,od->o', w1_mat, G, w1_mat)
    var = jnp.maximum(sumsq / m - mean_wx * mean_wx, 0.0)   # biased var (torch BN fwd)
    mean = mean_wx + b1
    rstd = lax.rsqrt(var + BN_EPS)
    scale = gamma * rstd
    shift = beta - mean * scale

    # Fold BN into the 1x1 conv:  scale*(W x + b1) + shift == (scale*W) x + (scale*b1 + shift)
    w1_eff = (w1_mat * scale[:, None]).astype(compute_dtype)              # [Co, Cin]
    b1_eff = (b1 * scale + shift).reshape(Cout, 1).astype(jnp.float32)    # [Co, 1]

    # ConvTranspose2d weights, one Co-tall row block per (kh, kw) tap:
    #   wkk_T[(kh*K + kw)*Co + cd, cs] = w2[cs, cd, kh, kw]
    wkk_T = jnp.transpose(w2, (2, 3, 1, 0)).reshape(k * k * Cout, Cout).astype(compute_dtype)
    b2_col = b2.reshape(Cout, 1).astype(jnp.float32)

    cp = dict(dimension_semantics=("parallel",))
    vl = _vmem_limit_bytes()
    if vl is not None:
        cp["vmem_limit_bytes"] = vl

    # ---- pass 2: fused (1x1 conv + BN + ReLU) -> phase-decomposed ConvTranspose2d ----
    # TODO(synk): for production sizes (large H*W, large Co) add a row-tiled grid axis
    # with a ceil((K-S)/S)-row halo so `t` ([K*K*Co, rows*W]) stays within ~24-32 MiB on
    # v7x; conversely, for tiny images block several batch elements per grid step.
    out_pad = pl.pallas_call(
        functools.partial(_fused_transup_kernel, H=H, W=W, K=k, S=s, Qh=Qh, Qw=Qw),
        grid=(N,),
        in_specs=[pl.BlockSpec((1, Cin, HW), lambda n: (n, 0, 0)),
                  pl.BlockSpec((Cout, Cin), lambda n: (0, 0)),
                  pl.BlockSpec((Cout, 1), lambda n: (0, 0)),
                  pl.BlockSpec((k * k * Cout, Cout), lambda n: (0, 0)),
                  pl.BlockSpec((Cout, 1), lambda n: (0, 0))],
        out_specs=pl.BlockSpec((1, Cout, Qh * s, Qw * s), lambda n: (n, 0, 0, 0)),
        out_shape=jax.ShapeDtypeStruct((N, Cout, Qh * s, Qw * s), jnp.float32),
        scratch_shapes=[pltpu.VMEM((Cout, Qh, Qw), jnp.float32)],
        compiler_params=pltpu.CompilerParams(**cp),
    )(x_flat, w1_eff, b1_eff, wkk_T, b2_col)

    # crop the phase padding (cheap fused XLA slice); layout is already NCHW
    return out_pad[:, :, :Ho, :Wo]


# ----------------------------------------------------------------------------
# Pure-JAX reference (scatter formulation of ConvTranspose2d) for verification.
# ----------------------------------------------------------------------------
def reference(x_nchw, params, *, kernel_size, stride):
    w1, b1, gamma, beta, w2, b2 = params
    k, s = kernel_size, stride
    y = jnp.einsum('nchw,oc->nohw', x_nchw, w1[:, :, 0, 0]) + b1[None, :, None, None]
    mean = jnp.mean(y, axis=(0, 2, 3), keepdims=True)
    var = jnp.mean(jnp.square(y - mean), axis=(0, 2, 3), keepdims=True)
    y = (y - mean) / jnp.sqrt(var + BN_EPS) * gamma[None, :, None, None] \
        + beta[None, :, None, None]
    y = jnp.maximum(y, 0.0)
    N, Co, H, W = y.shape
    Ho, Wo = (H - 1) * s + k, (W - 1) * s + k
    out = jnp.zeros((N, Co, Ho, Wo), jnp.float32) + b2[None, :, None, None]
    for kh in range(k):
        for kw in range(k):
            contrib = jnp.einsum('nchw,cd->ndhw', y, w2[:, :, kh, kw])
            out = out.at[:, :, kh:kh + (H - 1) * s + 1:s,
                               kw:kw + (W - 1) * s + 1:s].add(contrib)
    return out


if __name__ == "__main__":
    # module config
    in_channels, out_channels, kernel_size, stride = 4, 8, 3, 2
    N, H, W = 2, 16, 16

    key = jax.random.PRNGKey(0)
    k_x, k_w1, k_b1, k_g, k_bt, k_w2, k_b2 = jax.random.split(key, 7)

    x = jax.random.normal(k_x, (N, in_channels, H, W), jnp.float32)

    # deterministic synthetic parameters (torch shape conventions)
    w1 = 0.2 * jax.random.normal(k_w1, (out_channels, in_channels, 1, 1), jnp.float32)
    b1 = 0.1 * jax.random.normal(k_b1, (out_channels,), jnp.float32)
    gamma = 1.0 + 0.1 * jax.random.normal(k_g, (out_channels,), jnp.float32)
    beta = 0.1 * jax.random.normal(k_bt, (out_channels,), jnp.float32)
    w2 = 0.2 * jax.random.normal(k_w2, (out_channels, out_channels,
                                        kernel_size, kernel_size), jnp.float32)
    b2 = 0.1 * jax.random.normal(k_b2, (out_channels,), jnp.float32)
    params = (w1, b1, gamma, beta, w2, b2)

    Ho = (H - 1) * stride + kernel_size
    Wo = (W - 1) * stride + kernel_size

    # f32 path (exact reference semantics)
    out = jax.block_until_ready(
        transup_conv_new(x, params, kernel_size=kernel_size, stride=stride))
    ref = jax.block_until_ready(
        reference(x, params, kernel_size=kernel_size, stride=stride))
    assert out.shape == (N, out_channels, Ho, Wo), out.shape
    np.testing.assert_allclose(np.asarray(out), np.asarray(ref), rtol=1e-3, atol=1e-3)

    # bf16 matmul-input path (v6e/v7x MXU rates; f32 accumulation, f32 BN stats)
    out_bf16 = jax.block_until_ready(
        transup_conv_new(x, params, kernel_size=kernel_size, stride=stride,
                         compute_dtype=jnp.bfloat16))
    np.testing.assert_allclose(np.asarray(out_bf16), np.asarray(ref), rtol=5e-2, atol=5e-2)

    print("KERNEL_OK")
</pallas_src>

<mosaic_0001>
module attributes {stable_mosaic.version = 11 : i64} {
  func.func @_gram_stats_kernel(%arg0: i32, %arg1: i32, %arg2: memref<1x4x256xf32, #tpu.memory_space<vmem>>, %arg3: memref<1x4x5xf32, #tpu.memory_space<vmem>>) attributes {dimension_semantics = [#tpu.dimension_semantics<parallel>, #tpu.dimension_semantics<arbitrary>], iteration_bounds = array<i64: 2, 1>, scalar_prefetch = 0 : i64, scratch_operands = 0 : i64, tpu.core_type = #tpu.core_type<tc>, window_params = [{transform_indices = @transform_0, window_bounds = array<i64: 1, 4, 256>}, {transform_indices = @transform_1, window_bounds = array<i64: 1, 4, 5>}]} {
    %c0_i32 = arith.constant 0 : i32
    %0 = arith.cmpi eq, %arg1, %c0_i32 : i32
    %1 = arith.extui %0 : i1 to i32
    %c0_i32_0 = arith.constant 0 : i32
    %2 = arith.cmpi ne, %1, %c0_i32_0 : i32
    scf.if %2 {
      %cst_10 = arith.constant 0.000000e+00 : f32
      %13 = vector.broadcast %cst_10 : f32 to vector<1x4x5xf32>
      %c0_11 = arith.constant 0 : index
      %c0_12 = arith.constant 0 : index
      %c0_13 = arith.constant 0 : index
      %14 = vector.load %arg3[%c0_11, %c0_12, %c0_13] : memref<1x4x5xf32, #tpu.memory_space<vmem>>, vector<1x4x5xf32>
      tpu.vector_store %arg3[%c0_11, %c0_12, %c0_13], %13 {strides = array<i32>} : memref<1x4x5xf32, #tpu.memory_space<vmem>>, vector<1x4x5xf32>,
    } else {
    }
    %c0 = arith.constant 0 : index
    %c0_1 = arith.constant 0 : index
    %c0_2 = arith.constant 0 : index
    %3 = vector.load %arg2[%c0, %c0_1, %c0_2] : memref<1x4x256xf32, #tpu.memory_space<vmem>>, vector<1x4x256xf32>
    %4 = vector.shape_cast %3 : vector<1x4x256xf32> to vector<4x256xf32>
    %cst = arith.constant dense<0.000000e+00> : vector<4x4xf32>
    %5 = tpu.matmul %4, %4, %cst {dimension_numbers = #tpu.dot_dimension_numbers<[1], [1], [0], [0], [0, 0, 1, 0], [], []>} : vector<4x256xf32>, vector<4x256xf32>, vector<4x4xf32> -> vector<4x4xf32>
    %cst_3 = arith.constant dense<0.000000e+00> : vector<4xf32>
    %6 = vector.multi_reduction <add>, %4, %cst_3 [1] : vector<4x256xf32> to vector<4xf32>
    %7 = vector.shape_cast %6 : vector<4xf32> to vector<4x1xf32>
    %c0_4 = arith.constant 0 : index
    %c0_5 = arith.constant 0 : index
    %c0_6 = arith.constant 0 : index
    %8 = vector.load %arg3[%c0_4, %c0_5, %c0_6] : memref<1x4x5xf32, #tpu.memory_space<vmem>>, vector<1x4x5xf32>
    %9 = tpu.concatenate %5, %7 in 1 : vector<4x4xf32>, vector<4x1xf32> -> vector<4x5xf32>
    %10 = vector.shape_cast %9 : vector<4x5xf32> to vector<1x4x5xf32>
    %11 = arith.addf %8, %10 : vector<1x4x5xf32>
    %c0_7 = arith.constant 0 : index
    %c0_8 = arith.constant 0 : index
    %c0_9 = arith.constant 0 : index
    %12 = vector.load %arg3[%c0_7, %c0_8, %c0_9] : memref<1x4x5xf32, #tpu.memory_space<vmem>>, vector<1x4x5xf32>
    tpu.vector_store %arg3[%c0_7, %c0_8, %c0_9], %11 {strides = array<i32>} : memref<1x4x5xf32, #tpu.memory_space<vmem>>, vector<1x4x5xf32>,
    return
  }
  func.func @transform_0(%arg0: i32, %arg1: i32) -> (i32, i32, i32) {
    %c0_i32 = arith.constant 0 : i32
    %c0_i32_0 = arith.constant 0 : i32
    return %arg0, %c0_i32, %arg1 : i32, i32, i32
  }
  func.func @transform_1(%arg0: i32, %arg1: i32) -> (i32, i32, i32) {
    %c0_i32 = arith.constant 0 : i32
    %c0_i32_0 = arith.constant 0 : i32
    %c0_i32_1 = arith.constant 0 : i32
    return %arg0, %c0_i32, %c0_i32_0 : i32, i32, i32
  }
}

</mosaic_0001>

<llo_original>
// kernel: tpu_custom_call.1
$region0: #{tpu_custom_call.1}
  #allocation0 [shape = 'u32[]', space=smem, size = 0x4, offset = 0x4, fixed_abs, tag = 'smem constant byte address 0x4 - core index']
  #allocation1 [shape = 'u32[144,128]{1,0:T(1,128)}', space=vmem, size = 0x12000, scoped, tag = 'internal scratch']
  %s0 = inlined_call_operand.hbm [shape: f32[2,4,256], index: 0, kind: input, shape index: {}]
  %s1 = inlined_call_operand.hbm [shape: f32[2,4,5], index: 1, kind: output, shape index: {}]
  %s2 = sld [smem:[#allocation0]]
  $region45: #{tpu_custom_call.1} parent=0
    _
  %s4 = ssub.s32 1, %s2
  %s5 = scalar_select 0, %s4, %s2
  $region1: #{tpu_custom_call.1} parent=0
    #allocation2 [shape = 'u8[8192]{0}', space=vmem, size = 0x2000, scoped, tag = 'input window, operand 0']
    #allocation3 [shape = 's32[2]{0}', space=sflag, size = 0x8, scoped, tag = 'scoped memory for tpu_custom_call.1']
    #allocation4 [shape = 's32[2]{0}', space=sflag, size = 0x8, scoped, tag = 'scoped memory for tpu_custom_call.1']
    #allocation5 [shape = 'u8[4096]{0}', space=vmem, size = 0x1000, scoped, tag = 'output window, operand 0']
    %6 = vsyncpa [#allocation3], 0
    %s7 = scalar_lea.sflag [#allocation3], 1
    %8 = vsyncpa %s7, 0
    %9 = vsyncpa [#allocation4], 0
    %s10 = scalar_lea.sflag [#allocation4], 1
    %11 = vsyncpa %s10, 0
    loop: start=0, step=1, limit=4
    $region2: #{tpu_custom_call.1} parent=1 // loop_pre_header
      _
    $region3: #{tpu_custom_call.1} parent=1 // loop_header
      %s13 = sphi 0, %s17
      %p14 = scmp.ge.s32.totalorder %s13, 4
      %s20 = sphi 0, %s32
      %s21 = sphi 0, %s28
      %s22 = sphi 0, %s20
      %s23 = sphi 0, %s21
      %s24 = sphi 0, %s22
      %s25 = sphi 0, %s23
      %s37 = sphi 0, %s39
      %s40 = sphi 0, %s37
      %s41 = sphi 0, %s40
      %s57 = sphi 0, %s41
      %s63 = sphi 0, %s65
      %s66 = sphi 0, %s63
      %s67 = sphi 0, %s66
      %s83 = sphi 0, %s67
    $region4: #{tpu_custom_call.1} parent=1 // loop_header_branch
      %16 = sbr.rel (%p14) target = $region8
    $region5: #{tpu_custom_call.1} parent=1 // loop_body
      %s18 = ssub.s32 %s13, 1
      %s19 = ssub.s32 %s13, 2
      %s26 = sadd.s32 1, %s21
      %p27 = scmp.ge.s32.totalorder %s26, 1
      %s28 = scalar_select %p27, 0, %s26
      %s29 = sadd.s32 1, %s20
      %s30 = scalar_select %p27, %s29, %s20
      %p31 = scmp.ge.s32.totalorder %s30, 2
      %s32 = scalar_select %p31, 0, %s30
      %s33 = ssub.s32 %s20, %s32
      %s34 = ssub.s32 %s21, %s28
      %s35 = sor.u32 %s33, %s34
      %p36 = scmp.eq.s32.totalorder %s35, 0
      %s38 = sadd.s32 %s37, 1
      %s39 = scalar_select %p36, %s37, %s38
      %p42 = pneg %p36
      %p43 = scmp.eq.s32.totalorder %s13, 1
      %p44 = por %p42, %p43
      %p45 = scmp.ne.s32.totalorder %s37, %s40
      %p46 = scmp.eq.s32.totalorder %s13, 0
      %p47 = por %p45, %p46
      %p48 = scmp.ne.s32.totalorder %s37, %s40
      %p49 = scmp.eq.s32.totalorder %s18, 1
      %p50 = por %p48, %p49
      %p51 = scmp.ne.s32.totalorder %s40, %s41
      %p52 = scmp.eq.s32.totalorder %s18, 0
      %p53 = por %p51, %p52
      %p54 = scmp.ne.s32.totalorder %s40, %s41
      %p55 = scmp.eq.s32.totalorder %s19, 1
      %p56 = por %p54, %p55
      %p58 = scmp.ne.s32.totalorder %s41, %s57
      %p59 = scmp.eq.s32.totalorder %s19, 0
      %p60 = por %p58, %p59
      %s61 = ssub.s32 %s20, %s32
      %p62 = scmp.eq.s32.totalorder %s61, 0
      %s64 = sadd.s32 %s63, 1
      %s65 = scalar_select %p62, %s63, %s64
      %p68 = pneg %p62
      %p69 = scmp.eq.s32.totalorder %s13, 1
      %p70 = por %p68, %p69
      %p71 = scmp.ne.s32.totalorder %s63, %s66
      %p72 = scmp.eq.s32.totalorder %s13, 0
      %p73 = por %p71, %p72
      %p74 = scmp.ne.s32.totalorder %s63, %s66
      %p75 = scmp.eq.s32.totalorder %s18, 1
      %p76 = por %p74, %p75
      %p77 = scmp.ne.s32.totalorder %s66, %s67
      %p78 = scmp.eq.s32.totalorder %s18, 0
      %p79 = por %p77, %p78
      %p80 = scmp.ne.s32.totalorder %s66, %s67
      %p81 = scmp.eq.s32.totalorder %s19, 1
      %p82 = por %p80, %p81
      %p84 = scmp.ne.s32.totalorder %s67, %s83
      %p85 = scmp.eq.s32.totalorder %s19, 0
      %p86 = por %p84, %p85
      %p87 = scmp.le.s32.totalorder 1, %s13
      %p88 = scmp.lt.s32.totalorder %s13, 3
      %p89 = pnand %p87, %p88
      %p90 = pneg %p89
      // Predicated region
      $region9: #{tpu_custom_call.1} parent=5 // pred_check
        _
      $region10: #{tpu_custom_call.1} parent=5 // pred_check_branch
        %92 = sbr.rel (%p89) target = $region12
      $region11: #{tpu_custom_call.1} parent=5 // pred_region
        %s93 = ssub.s32 %s13, 1
      $region12: #{tpu_custom_call.1} parent=5 // pred_fallthru
        _
      %p94 = scmp.lt.s32.totalorder %s13, 2
      // Predicated region
      $region13: #{tpu_custom_call.1} parent=5 // pred_check
        %p95 = pneg %p94
      $region14: #{tpu_custom_call.1} parent=5 // pred_check_branch
        %97 = sbr.rel (%p95) target = $region16
      $region15: #{tpu_custom_call.1} parent=5 // pred_region
        // Predicated region
        $region17: #{tpu_custom_call.1} parent=15 // pred_check
          %p98 = pneg %p47
        $region18: #{tpu_custom_call.1} parent=15 // pred_check_branch
          %100 = sbr.rel (%p98) target = $region20
        $region19: #{tpu_custom_call.1} parent=15 // pred_region
          %s101 = sand.u32 %s37, 1
          %s102 = scalar_lea.sflag [#allocation3], %s101
          %s103 = sand.u32 %s37, 1
          %s104 = smul.addr %s103, 8
          %s105 = scalar_lea.vmem [#allocation2], %s104
          %s106 = smul.u32 2, %s21
          %s108 = ssub.s32 128, 128
          %109 = vsyncadd %s102, %s108
          %s110 = smul.addr %s20, 2
          %s111 = sadd.s32 %s106, %s110
          %s112 = smul.addr %s111, 64
          %s113 = scalar_lea.hbm %s0, %s112
          %s115 = sshll.u32 %s105, 4
          %s116 = int_to_ptr.vmem [resolvable:$true] %s115
          %118 = dma.hbm_to_vmem [thread:$0]  %s113, 128, %s116, %s102
        $region20: #{tpu_custom_call.1} parent=15 // pred_fallthru
          _
      $region16: #{tpu_custom_call.1} parent=5 // pred_fallthru
        _
      %p119 = scmp.le.s32.totalorder 1, %s13
      %p120 = scmp.lt.s32.totalorder %s13, 3
      %p121 = pnand %p119, %p120
      %p122 = pneg %p121
      // Predicated region
      $region21: #{tpu_custom_call.1} parent=5 // pred_check
        _
      $region22: #{tpu_custom_call.1} parent=5 // pred_check_branch
        %124 = sbr.rel (%p121) target = $region24
      $region23: #{tpu_custom_call.1} parent=5 // pred_region
        %s125 = ssub.s32 %s13, 1
        %s126 = sand.u32 %s40, 1
        %s127 = scalar_lea.sflag [#allocation3], %s126
        %s128 = sand.u32 %s40, 1
        %s129 = smul.addr %s128, 8
        %s130 = scalar_lea.vmem [#allocation2], %s129
        // Predicated region
        $region25: #{tpu_custom_call.1} parent=23 // pred_check
          %p131 = pneg %p53
        $region26: #{tpu_custom_call.1} parent=23 // pred_check_branch
          %133 = sbr.rel (%p131) target = $region28
        $region27: #{tpu_custom_call.1} parent=23 // pred_region
          %134 = dma.done %s127, 128
        $region28: #{tpu_custom_call.1} parent=23 // pred_fallthru
          _
        %s135 = sand.u32 %s40, 1
        %s136 = scalar_lea.sflag [#allocation3], %s135
        %s137 = sand.u32 %s40, 1
        %s138 = smul.addr %s137, 8
        %s139 = scalar_lea.vmem [#allocation2], %s138
        %p140 = pneg %p53
        %p141 = pneg %p50
        %p142 = pneg %p79
        %p143 = pneg %p76
        %s144 = sand.u32 %s66, 1
        %s145 = scalar_lea.sflag [#allocation4], %s144
        %s146 = sand.u32 %s66, 1
        %s147 = smul.addr %s146, 4
        %s148 = scalar_lea.vmem [#allocation5], %s147
        %s149 = smul.u32 2, %s23
        %p150 = scmp.eq.s32.totalorder %s23, 0
        // Predicated region
        $region29: #{tpu_custom_call.1} parent=23 // pred_check
          %p151 = pneg %p150
        $region30: #{tpu_custom_call.1} parent=23 // pred_check_branch
          %153 = sbr.rel (%p151) target = $region32
        $region31: #{tpu_custom_call.1} parent=23 // pred_region
          %vm154 = vcmask 35840
          %155 = vst.msk [vmem:[%s148] sm:$0xf] %vm154, 0.0
        $region32: #{tpu_custom_call.1} parent=23 // pred_fallthru
          _
        %v156 = vld [vmem:[%s130] sm:$0xff]
        %v158 = vcombine.high %v156, %v156
        %160 = vmatprep.subr.mxu0 %v158
        %161 = vmatpush1.xpose.msra.mxu0 %v156
        %162 = vmatprep.subr.mxu0 0.0
        %163 = vmatpush1.xpose.msra.mxu0 0.0
        %164 = vmatprep.subr.mxu0 0.0
        %165 = vmatpush1.xpose.msra.mxu0 0.0
        %166 = vmatprep.subr.mxu0 0.0
        %167 = vmatpush1.xpose.msra.mxu0 0.0
        %168 = vmatprep.subr.mxu0 0.0
        %169 = vmatpush1.xpose.msra.mxu0 0.0
        %170 = vmatprep.subr.mxu0 0.0
        %171 = vmatpush1.xpose.msra.mxu0 0.0
        %172 = vmatprep.subr.mxu0 0.0
        %173 = vmatpush1.xpose.msra.mxu0 0.0
        %174 = vmatprep.subr.mxu0 0.0
        %175 = vmatpush1.xpose.msra.mxu0 0.0
        %176 = vmatprep.subr.mxu0 0.0
        %177 = vmatpush1.xpose.msra.mxu0 0.0
        %178 = vmatprep.subr.mxu0 0.0
        %179 = vmatpush1.xpose.msra.mxu0 0.0
        %180 = vmatprep.subr.mxu0 0.0
        %181 = vmatpush1.xpose.msra.mxu0 0.0
        %182 = vmatprep.subr.mxu0 0.0
        %183 = vmatpush1.xpose.msra.mxu0 0.0
        %184 = vmatprep.subr.mxu0 0.0
        %185 = vmatpush1.xpose.msra.mxu0 0.0
        %186 = vmatprep.subr.mxu0 0.0
        %187 = vmatpush1.xpose.msra.mxu0 0.0
        %188 = vmatprep.subr.mxu0 0.0
        %189 = vmatpush1.xpose.msra.mxu0 0.0
        %190 = vmatprep.subr.mxu0 0.0
        %191 = vmatpush1.xpose.msra.mxu0 0.0
        %192 = vmatprep.subr.mxu0 0.0
        %193 = vmatpush1.xpose.msra.mxu0 0.0
        %194 = vmatprep.subr.mxu0 0.0
        %195 = vmatpush1.xpose.msra.mxu0 0.0
        %196 = vmatprep.subr.mxu0 0.0
        %197 = vmatpush1.xpose.msra.mxu0 0.0
        %198 = vmatprep.subr.mxu0 0.0
        %199 = vmatpush1.xpose.msra.mxu0 0.0
        %200 = vmatprep.subr.mxu0 0.0
        %201 = vmatpush1.xpose.msra.mxu0 0.0
        %202 = vmatprep.subr.mxu0 0.0
        %203 = vmatpush1.xpose.msra.mxu0 0.0
        %204 = vmatprep.subr.mxu0 0.0
        %205 = vmatpush1.xpose.msra.mxu0 0.0
        %206 = vmatprep.subr.mxu0 0.0
        %207 = vmatpush1.xpose.msra.mxu0 0.0
        %208 = vmatprep.subr.mxu0 0.0
        %209 = vmatpush1.xpose.msra.mxu0 0.0
        %210 = vmatprep.subr.mxu0 0.0
        %211 = vmatpush1.xpose.msra.mxu0 0.0
        %212 = vmatprep.subr.mxu0 0.0
        %213 = vmatpush1.xpose.msra.mxu0 0.0
        %214 = vmatprep.subr.mxu0 0.0
        %215 = vmatpush1.xpose.msra.mxu0 0.0
        %216 = vmatprep.subr.mxu0 0.0
        %217 = vmatpush1.xpose.msra.mxu0 0.0
        %218 = vmatprep.subr.mxu0 0.0
        %219 = vmatpush1.xpose.msra.mxu0 0.0
        %220 = vmatprep.subr.mxu0 0.0
        %221 = vmatpush1.xpose.msra.mxu0 0.0
        %222 = vmatprep.subr.mxu0 0.0
        %223 = vmatpush1.xpose.msra.mxu0 0.0
        %224 = vmatprep.mubr.f32.mxu0 %v158
        %225 = vmatmul.mubr.f32.gmra.mrb[0].mxu0 %v156
        %v226 = vpop.f32.mrb[0].mxu0
        %v227 = vadd.f32 0.0, %v226
        %v228 = vpop.f32.mrb[0].mxu0
        %229 = vdwg.mxu0
        %vm230 = vcmask 1043456
        %v231 = vsel %vm230, %v156, 0.0
        %v232 = vsel %vm230, %v158, 0.0
        %v233 = vadd.f32 %v231, %v232
        %234 = vadd.xlane.f32.xlu0 %v233
        %v235 = vpop.xlane.xlu0 %234
        %v236 = vld [vmem:[%s148] sm:$0xf]
        %vm237 = vcmask 31744
        %v238 = vsel %vm237, %v227, %v235
        %v239 = vadd.f32 %v236, %v238
        %vm240 = vcmask 35840
        %241 = vst.msk [vmem:[%s148] sm:$0xf] %vm240, %v239
        %s242 = sand.u32 %s66, 1
        %s243 = scalar_lea.sflag [#allocation4], %s242
        %s244 = sand.u32 %s66, 1
        %s245 = smul.addr %s244, 4
        %s246 = scalar_lea.vmem [#allocation5], %s245
        // Predicated region
        $region33: #{tpu_custom_call.1} parent=23 // pred_check
          %p247 = pneg %p76
        $region34: #{tpu_custom_call.1} parent=23 // pred_check_branch
          %249 = sbr.rel (%p247) target = $region36
        $region35: #{tpu_custom_call.1} parent=23 // pred_region
          %s251 = ssub.s32 64, 64
          %252 = vsyncadd %s243, %s251
          %s253 = smul.addr %s22, 64
          %s254 = scalar_lea.hbm %s1, %s253
          %s256 = sshll.u32 %s246, 4
          %s257 = int_to_ptr.vmem [resolvable:$true] %s256
          %259 = dma.vmem_to_hbm [thread:$0]  %s257, 64, %s254, %s243
        $region36: #{tpu_custom_call.1} parent=23 // pred_fallthru
          _
      $region24: #{tpu_custom_call.1} parent=5 // pred_fallthru
        _
      %p260 = scmp.le.s32.totalorder 2, %s13
      // Predicated region
      $region37: #{tpu_custom_call.1} parent=5 // pred_check
        %p261 = pneg %p260
      $region38: #{tpu_custom_call.1} parent=5 // pred_check_branch
        %263 = sbr.rel (%p261) target = $region40
      $region39: #{tpu_custom_call.1} parent=5 // pred_region
        %s264 = ssub.s32 %s13, 2
        // Predicated region
        $region41: #{tpu_custom_call.1} parent=39 // pred_check
          %p265 = pneg %p82
        $region42: #{tpu_custom_call.1} parent=39 // pred_check_branch
          %267 = sbr.rel (%p265) target = $region44
        $region43: #{tpu_custom_call.1} parent=39 // pred_region
          %s268 = sand.u32 %s67, 1
          %s269 = scalar_lea.sflag [#allocation4], %s268
          %s270 = sand.u32 %s67, 1
          %s271 = smul.addr %s270, 4
          %s272 = scalar_lea.vmem [#allocation5], %s271
          %273 = dma.done %s269, 64
        $region44: #{tpu_custom_call.1} parent=39 // pred_fallthru
          _
      $region40: #{tpu_custom_call.1} parent=5 // pred_fallthru
        _
    $region6: #{tpu_custom_call.1} parent=1 // loop_footer
      %s17 = sadd.s32 1, %s13
    $region7: #{tpu_custom_call.1} parent=1 // loop_footer_branch
      %12 = sbr.rel target = $region3
    $region8: #{tpu_custom_call.1} parent=1 // loop_exit
      _
    %274 = vsyncpa [#allocation3], 1
    %s275 = scalar_lea.sflag [#allocation3], 1
    %276 = vsyncpa %s275, 1
    %277 = vsyncpa [#allocation4], 1
    %s278 = scalar_lea.sflag [#allocation4], 1
    %279 = vsyncpa %s278, 1

</llo_original>
